<compile_context>
chip_gen: v7x
topology: tpu7x:2x2x1
jax: 0.10.0
libtpu: 0.0.40
codegen_flags: <defaults>
</compile_context>

<pallas_src>
import functools

import jax
import jax.numpy as jnp
from jax import lax
from jax.experimental import pallas as pl
from jax.experimental.pallas import tpu as pltpu

EPSILON_F = 1e-12


def eignn_kernel(F_ref, Sk_ref, X_ref, out_ref, *, gamma, threshold, max_iter,
                 check_every, matmul_dtype):
    F = F_ref[...]        # (m, m) f32
    Sk = Sk_ref[...]      # (n, n) f32
    X = X_ref[...]        # (m, n) f32

    # A = gamma * g(F) = gamma * F^T F / (||F^T F||_F + eps)
    # Contract dim 0 of F with dim 0 of F -> F^T F without materializing F.T.
    FF = lax.dot_general(F, F, dimension_numbers=(((0,), (0,)), ((), ())),
                         preferred_element_type=jnp.float32)
    fro_norm = jnp.sqrt(jnp.sum(FF * FF))
    A = (gamma / (fro_norm + EPSILON_F)) * FF          # stays f32

    # The dominant (m,n)x(n,n) matmul optionally runs with bf16 operands + f32 accumulate.
    Sk_c = Sk.astype(matmul_dtype)

    def f(z):
        zs = jnp.dot(z.astype(matmul_dtype), Sk_c,
                     preferred_element_type=jnp.float32)          # Z @ S_k     (m, n)
        return jnp.dot(A, zs, preferred_element_type=jnp.float32) + X  # A @ (Z S_k) + X

    # fwd_solver: z1 = f(0) == X exactly (A @ 0 == 0); then iterate, stopping as soon as
    # ||z_new - z||_F < threshold (checked every `check_every` steps) or after max_iter.
    thr_sq = jnp.float32(threshold) * jnp.float32(threshold)

    def cond_fn(carry):
        i, _, diff_sq = carry
        return jnp.logical_and(i < max_iter, diff_sq >= thr_sq)

    def body_fn(carry):
        i, z, _ = carry
        z_prev = z
        for _ in range(check_every):      # static unroll; check amortized over K steps
            z_prev = z
            z = f(z)
        d = z - z_prev                    # residual between the last two iterates (f32)
        diff_sq = jnp.sum(d * d)
        return (i + check_every, z, diff_sq)

    init = (jnp.int32(0), X, jnp.array(jnp.inf, jnp.float32))
    _, z_final, _ = lax.while_loop(cond_fn, body_fn, init)
    out_ref[...] = z_final


def eignn_forward(F, S_k, X, gamma, threshold=1e-6, max_iter=50,
                  check_every=2, matmul_dtype=jnp.float32):
    m, n = X.shape

    # Pick a check interval that divides max_iter so we never exceed the reference
    # iteration budget.
    check_every = max(1, int(check_every))
    while max_iter % check_every:
        check_every -= 1

    kernel = functools.partial(
        eignn_kernel,
        gamma=float(gamma),
        threshold=float(threshold),
        max_iter=int(max_iter),
        check_every=check_every,
        matmul_dtype=jnp.dtype(matmul_dtype),
    )

    # Rough resident-VMEM budget: F + FF/A (m,m), S_k (n,n) f32 (+ low-precision copy),
    # X / out / z / z_prev / z@S_k (m,n).  x2 headroom for compiler temporaries.
    f32b = 4
    est = f32b * (2 * m * m + n * n + 6 * m * n)
    if jnp.dtype(matmul_dtype) != jnp.float32:
        est += jnp.dtype(matmul_dtype).itemsize * (n * n + m * n)
    vmem_limit = int(min(max(2 * est, 32 * 1024 * 1024), 112 * 1024 * 1024))

    return pl.pallas_call(
        kernel,
        out_shape=jax.ShapeDtypeStruct((m, n), jnp.float32),
        in_specs=[
            pl.BlockSpec(memory_space=pltpu.MemorySpace.VMEM),   # F
            pl.BlockSpec(memory_space=pltpu.MemorySpace.VMEM),   # S_k
            pl.BlockSpec(memory_space=pltpu.MemorySpace.VMEM),   # X
        ],
        out_specs=pl.BlockSpec(memory_space=pltpu.MemorySpace.VMEM),
        compiler_params=pltpu.CompilerParams(vmem_limit_bytes=vmem_limit),
    )(F, S_k, X)


if __name__ == "__main__":
    key = jax.random.PRNGKey(0)
    m, n = 32, 128          # feature dim, number of nodes
    k = 2                   # adjacency power
    gamma = 0.8
    threshold = 1e-6
    max_iter = 50

    k_F, k_A, k_X = jax.random.split(key, 3)

    # Parameter F: xavier_uniform_(F), F is (m, m)
    bound = (6.0 / (m + m)) ** 0.5
    F = jax.random.uniform(k_F, (m, m), jnp.float32, -bound, bound)

    # Deterministic symmetric normalized adjacency S = D^{-1/2} (A + I) D^{-1/2},
    # then S_k = S^k (the module precomputes this on the host).
    A_rand = jax.random.uniform(k_A, (n, n), jnp.float32)
    A_adj = ((A_rand + A_rand.T) > 1.0).astype(jnp.float32) + jnp.eye(n, dtype=jnp.float32)
    d_inv_sqrt = 1.0 / jnp.sqrt(jnp.sum(A_adj, axis=1))
    S = A_adj * d_inv_sqrt[:, None] * d_inv_sqrt[None, :]
    S_k = S
    for _ in range(k - 1):
        S_k = S_k @ S

    # Input X: (m, n) = (features, nodes)
    X = jax.random.normal(k_X, (m, n), jnp.float32)

    # Full-precision kernel (default, matches module numerics).
    Z = eignn_forward(F, S_k, X, gamma, threshold, max_iter)
    Z = jax.block_until_ready(Z)

    # Reduced-precision dominant matmul (perf path); checked with a looser tolerance.
    Z_bf16 = eignn_forward(F, S_k, X, gamma, threshold, max_iter,
                           matmul_dtype=jnp.bfloat16)
    Z_bf16 = jax.block_until_ready(Z_bf16)

    # Plain-JAX reference of the same fixed-point iteration.
    FF = F.T @ F
    G = FF / (jnp.linalg.norm(FF) + EPSILON_F)
    z = gamma * G @ jnp.zeros_like(X) @ S_k + X
    for _ in range(max_iter):
        z_new = gamma * G @ z @ S_k + X
        diff = float(jnp.linalg.norm(z_new - z))
        z = z_new
        if diff < threshold:
            break

    assert Z.shape == (m, n) and Z.dtype == jnp.float32
    assert jnp.allclose(Z, z, atol=1e-4, rtol=1e-4), "f32 kernel/reference mismatch"
    rel = float(jnp.linalg.norm(Z_bf16 - z) / jnp.linalg.norm(z))
    assert rel < 5e-2, f"bf16 kernel/reference relative error too large: {rel}"
    print("KERNEL_OK")
</pallas_src>

<mosaic_0001>
module attributes {stable_mosaic.version = 11 : i64} {
  func.func @eignn_kernel(%arg0: memref<32x32xf32, #tpu.memory_space<vmem>>, %arg1: memref<128x128xf32, #tpu.memory_space<vmem>>, %arg2: memref<32x128xf32, #tpu.memory_space<vmem>>, %arg3: memref<32x128xf32, #tpu.memory_space<vmem>>) attributes {dimension_semantics = [], scalar_prefetch = 0 : i64, scratch_operands = 0 : i64, tpu.core_type = #tpu.core_type<tc>} {
    %c0 = arith.constant 0 : index
    %c0_0 = arith.constant 0 : index
    %0 = vector.load %arg0[%c0, %c0_0] : memref<32x32xf32, #tpu.memory_space<vmem>>, vector<32x32xf32>
    %c0_1 = arith.constant 0 : index
    %c0_2 = arith.constant 0 : index
    %1 = vector.load %arg1[%c0_1, %c0_2] : memref<128x128xf32, #tpu.memory_space<vmem>>, vector<128x128xf32>
    %c0_3 = arith.constant 0 : index
    %c0_4 = arith.constant 0 : index
    %2 = vector.load %arg2[%c0_3, %c0_4] : memref<32x128xf32, #tpu.memory_space<vmem>>, vector<32x128xf32>
    %cst = arith.constant dense<0.000000e+00> : vector<32x32xf32>
    %3 = tpu.matmul %0, %0, %cst {dimension_numbers = #tpu.dot_dimension_numbers<[0], [0], [1], [1], [0, 1, 1, 1], [], []>} : vector<32x32xf32>, vector<32x32xf32>, vector<32x32xf32> -> vector<32x32xf32>
    %4 = arith.mulf %3, %3 : vector<32x32xf32>
    %5 = vector.shape_cast %4 : vector<32x32xf32> to vector<1x32x32xf32>
    %cst_5 = arith.constant dense<0.000000e+00> : vector<1xf32>
    %6 = vector.multi_reduction <add>, %5, %cst_5 [1, 2] : vector<1x32x32xf32> to vector<1xf32>
    %7 = vector.shape_cast %6 : vector<1xf32> to vector<1x1x1xf32>
    %8 = vector.extract %7[0, 0, 0] : f32 from vector<1x1x1xf32>
    %9 = math.sqrt %8 : f32
    %cst_6 = arith.constant 9.99999996E-13 : f32
    %10 = arith.addf %9, %cst_6 : f32
    %cst_7 = arith.constant 8.000000e-01 : f32
    %11 = arith.divf %cst_7, %10 : f32
    %12 = vector.broadcast %11 : f32 to vector<32x32xf32>
    %13 = arith.mulf %12, %3 : vector<32x32xf32>
    %cst_8 = arith.constant 9.99999997E-7 : f32
    %cst_9 = arith.constant 9.99999997E-7 : f32
    %14 = arith.mulf %cst_8, %cst_9 : f32
    %c0_i32 = arith.constant 0 : i32
    %cst_10 = arith.constant 0x7F800000 : f32
    %15:3 = scf.while (%arg4 = %c0_i32, %arg5 = %2, %arg6 = %cst_10) : (i32, vector<32x128xf32>, f32) -> (i32, vector<32x128xf32>, f32) {
      %c50_i32 = arith.constant 50 : i32
      %17 = arith.cmpi slt, %arg4, %c50_i32 : i32
      %18 = arith.cmpf oge, %arg6, %14 : f32
      %19 = arith.andi %17, %18 : i1
      scf.condition(%19) %arg4, %arg5, %arg6 : i32, vector<32x128xf32>, f32
    } do {
    ^bb0(%arg4: i32, %arg5: vector<32x128xf32>, %arg6: f32):
      %cst_13 = arith.constant dense<0.000000e+00> : vector<32x128xf32>
      %17 = tpu.matmul %arg5, %1, %cst_13 {dimension_numbers = #tpu.dot_dimension_numbers<[1], [0], [0], [1], [0, 0, 1, 1], [], []>} : vector<32x128xf32>, vector<128x128xf32>, vector<32x128xf32> -> vector<32x128xf32>
      %cst_14 = arith.constant dense<0.000000e+00> : vector<32x128xf32>
      %18 = tpu.matmul %13, %17, %cst_14 {dimension_numbers = #tpu.dot_dimension_numbers<[1], [0], [0], [1], [0, 0, 1, 1], [], []>} : vector<32x32xf32>, vector<32x128xf32>, vector<32x128xf32> -> vector<32x128xf32>
      %19 = arith.addf %18, %2 : vector<32x128xf32>
      %cst_15 = arith.constant dense<0.000000e+00> : vector<32x128xf32>
      %20 = tpu.matmul %19, %1, %cst_15 {dimension_numbers = #tpu.dot_dimension_numbers<[1], [0], [0], [1], [0, 0, 1, 1], [], []>} : vector<32x128xf32>, vector<128x128xf32>, vector<32x128xf32> -> vector<32x128xf32>
      %cst_16 = arith.constant dense<0.000000e+00> : vector<32x128xf32>
      %21 = tpu.matmul %13, %20, %cst_16 {dimension_numbers = #tpu.dot_dimension_numbers<[1], [0], [0], [1], [0, 0, 1, 1], [], []>} : vector<32x32xf32>, vector<32x128xf32>, vector<32x128xf32> -> vector<32x128xf32>
      %22 = arith.addf %21, %2 : vector<32x128xf32>
      %23 = arith.subf %22, %19 : vector<32x128xf32>
      %24 = arith.mulf %23, %23 : vector<32x128xf32>
      %25 = vector.shape_cast %24 : vector<32x128xf32> to vector<1x32x128xf32>
      %cst_17 = arith.constant dense<0.000000e+00> : vector<1xf32>
      %26 = vector.multi_reduction <add>, %25, %cst_17 [1, 2] : vector<1x32x128xf32> to vector<1xf32>
      %27 = vector.shape_cast %26 : vector<1xf32> to vector<1x1x1xf32>
      %28 = vector.extract %27[0, 0, 0] : f32 from vector<1x1x1xf32>
      %c2_i32 = arith.constant 2 : i32
      %29 = arith.addi %arg4, %c2_i32 : i32
      scf.yield %29, %22, %28 : i32, vector<32x128xf32>, f32
    }
    %c0_11 = arith.constant 0 : index
    %c0_12 = arith.constant 0 : index
    %16 = vector.load %arg3[%c0_11, %c0_12] : memref<32x128xf32, #tpu.memory_space<vmem>>, vector<32x128xf32>
    tpu.vector_store %arg3[%c0_11, %c0_12], %15#1 {strides = array<i32>} : memref<32x128xf32, #tpu.memory_space<vmem>>, vector<32x128xf32>,
    return
  }
}

</mosaic_0001>

<llo_original>
// kernel: tpu_custom_call.1
$region0: #{tpu_custom_call.1}
  #allocation0 [shape = 'u32[]', space=smem, size = 0x4, offset = 0x4, fixed_abs, tag = 'smem constant byte address 0x4 - core index']
  #allocation1 [shape = 'u32[144,128]{1,0:T(1,128)}', space=vmem, size = 0x12000, scoped, tag = 'internal scratch']
  %s0 = inlined_call_operand.hbm [shape: f32[32,32], index: 0, kind: input, shape index: {}]
  %s1 = inlined_call_operand.hbm [shape: f32[128,128], index: 1, kind: input, shape index: {}]
  %s2 = inlined_call_operand.hbm [shape: f32[32,128], index: 2, kind: input, shape index: {}]
  %s3 = inlined_call_operand.hbm [shape: f32[32,128], index: 3, kind: output, shape index: {}]
  %s4 = sld [smem:[#allocation0]]
  $region41: #{tpu_custom_call.1} parent=0
    _
  %s6 = ssub.s32 1, %s4
  %s7 = scalar_select 0, %s6, %s4
  $region1: #{tpu_custom_call.1} parent=0
    #allocation2 [shape = 'u8[16384]{0}', space=vmem, size = 0x4000, scoped, tag = 'input window, operand 0, single buffered']
    #allocation3 [shape = 's32[1]{0}', space=sflag, size = 0x4, scoped, tag = 'scoped memory for tpu_custom_call.1']
    #allocation4 [shape = 's32[1]{0}', space=sflag, size = 0x4, scoped, tag = 'scoped memory for tpu_custom_call.1']
    #allocation5 [shape = 'u8[65536]{0}', space=vmem, size = 0x10000, scoped, tag = 'input window, operand 1, single buffered']
    #allocation6 [shape = 's32[1]{0}', space=sflag, size = 0x4, scoped, tag = 'scoped memory for tpu_custom_call.1']
    #allocation7 [shape = 'u8[16384]{0}', space=vmem, size = 0x4000, scoped, tag = 'input window, operand 2, single buffered']
    #allocation8 [shape = 'u8[16384]{0}', space=vmem, size = 0x4000, scoped, tag = 'output window, operand 0, single buffered']
    %8 = vsyncpa [#allocation3], 0
    %9 = vsyncpa [#allocation6], 0
    %10 = vsyncpa [#allocation4], 0
    // Predicated region
    $region2: #{tpu_custom_call.1} parent=1 // pred_check
      _
    $region3: #{tpu_custom_call.1} parent=1 // pred_check_branch
      %12 = sbr.rel (0) target = $region5
    $region4: #{tpu_custom_call.1} parent=1 // pred_region
      %s14 = ssub.s32 512, 512
      %15 = vsyncadd [#allocation3], %s14
      %s16 = sshll.u32 [#allocation2], 4
      %s17 = int_to_ptr.vmem [resolvable:$true] %s16
      %22 = dma.hbm_to_vmem [thread:$0]  %s0, 512, %s17, [#allocation3], 128, 128, 8
    $region5: #{tpu_custom_call.1} parent=1 // pred_fallthru
      _
    // Predicated region
    $region6: #{tpu_custom_call.1} parent=1 // pred_check
      _
    $region7: #{tpu_custom_call.1} parent=1 // pred_check_branch
      %24 = sbr.rel (0) target = $region9
    $region8: #{tpu_custom_call.1} parent=1 // pred_region
      %s26 = ssub.s32 2048, 2048
      %27 = vsyncadd [#allocation6], %s26
      %s28 = sshll.u32 [#allocation5], 4
      %s29 = int_to_ptr.vmem [resolvable:$true] %s28
      %34 = dma.hbm_to_vmem [thread:$0]  %s1, 2048, %s29, [#allocation6], 128, 128, 8
    $region9: #{tpu_custom_call.1} parent=1 // pred_fallthru
      _
    // Predicated region
    $region10: #{tpu_custom_call.1} parent=1 // pred_check
      _
    $region11: #{tpu_custom_call.1} parent=1 // pred_check_branch
      %36 = sbr.rel (0) target = $region13
    $region12: #{tpu_custom_call.1} parent=1 // pred_region
      %s38 = ssub.s32 512, 512
      %39 = vsyncadd [#allocation6], %s38
      %s40 = sshll.u32 [#allocation7], 4
      %s41 = int_to_ptr.vmem [resolvable:$true] %s40
      %46 = dma.hbm_to_vmem [thread:$0]  %s2, 512, %s41, [#allocation6], 128, 128, 8
    $region13: #{tpu_custom_call.1} parent=1 // pred_fallthru
      _
    // Predicated region
    $region14: #{tpu_custom_call.1} parent=1 // pred_check
      _
    $region15: #{tpu_custom_call.1} parent=1 // pred_check_branch
      %48 = sbr.rel (0) target = $region17
    $region16: #{tpu_custom_call.1} parent=1 // pred_region
      %49 = dma.done [#allocation3], 512
    $region17: #{tpu_custom_call.1} parent=1 // pred_fallthru
      _
    // Predicated region
    $region18: #{tpu_custom_call.1} parent=1 // pred_check
      _
    $region19: #{tpu_custom_call.1} parent=1 // pred_check_branch
      %51 = sbr.rel (0) target = $region21
    $region20: #{tpu_custom_call.1} parent=1 // pred_region
      %52 = dma.done [#allocation6], 2048
    $region21: #{tpu_custom_call.1} parent=1 // pred_fallthru
      _
    // Predicated region
    $region22: #{tpu_custom_call.1} parent=1 // pred_check
      _
    $region23: #{tpu_custom_call.1} parent=1 // pred_check_branch
      %54 = sbr.rel (0) target = $region25
    $region24: #{tpu_custom_call.1} parent=1 // pred_region
      %55 = dma.done [#allocation6], 512
    $region25: #{tpu_custom_call.1} parent=1 // pred_fallthru
      _
    %v56 = vld [vmem:[#allocation2] sm:$0xff]
    %v57 = vld [vmem:[#allocation2 + $0x8] sm:$0xff]
    %v58 = vld [vmem:[#allocation2 + $0x10] sm:$0xff]
    %v59 = vld [vmem:[#allocation2 + $0x18] sm:$0xff]
    %v60 = vld [vmem:[#allocation5] sm:$0xff]
    %v61 = vld [vmem:[#allocation5 + $0x8] sm:$0xff]
    %v62 = vld [vmem:[#allocation5 + $0x10] sm:$0xff]
    %v63 = vld [vmem:[#allocation5 + $0x18] sm:$0xff]
    %v64 = vld [vmem:[#allocation5 + $0x20] sm:$0xff]
    %v65 = vld [vmem:[#allocation5 + $0x28] sm:$0xff]
    %v66 = vld [vmem:[#allocation5 + $0x30] sm:$0xff]
    %v67 = vld [vmem:[#allocation5 + $0x38] sm:$0xff]
    %v68 = vld [vmem:[#allocation5 + $0x40] sm:$0xff]
    %v69 = vld [vmem:[#allocation5 + $0x48] sm:$0xff]
    %v70 = vld [vmem:[#allocation5 + $0x50] sm:$0xff]
    %v71 = vld [vmem:[#allocation5 + $0x58] sm:$0xff]
    %v72 = vld [vmem:[#allocation5 + $0x60] sm:$0xff]
    %v73 = vld [vmem:[#allocation5 + $0x68] sm:$0xff]
    %v74 = vld [vmem:[#allocation5 + $0x70] sm:$0xff]
    %v75 = vld [vmem:[#allocation5 + $0x78] sm:$0xff]
    %v76 = vld [vmem:[#allocation7] sm:$0xff]
    %v77 = vld [vmem:[#allocation7 + $0x8] sm:$0xff]
    %v78 = vld [vmem:[#allocation7 + $0x10] sm:$0xff]
    %v79 = vld [vmem:[#allocation7 + $0x18] sm:$0xff]
    %80 = vxpose.xlu0.b32.start [1/16] %v56, 128
    %81 = vxpose.xlu0.b32.cont [2/16] %v57, 128
    %82 = vxpose.xlu0.b32.cont [3/16] %v58, 128
    %83 = vxpose.xlu0.b32.cont [4/16] %v59, 128
    %84 = vxpose.xlu0.b32.cont [5/16] 0.0, 128
    %85 = vxpose.xlu0.b32.cont [6/16] 0.0, 128
    %86 = vxpose.xlu0.b32.cont [7/16] 0.0, 128
    %87 = vxpose.xlu0.b32.cont [8/16] 0.0, 128
    %88 = vxpose.xlu0.b32.cont [9/16] 0.0, 128
    %89 = vxpose.xlu0.b32.cont [10/16] 0.0, 128
    %90 = vxpose.xlu0.b32.cont [11/16] 0.0, 128
    %91 = vxpose.xlu0.b32.cont [12/16] 0.0, 128
    %92 = vxpose.xlu0.b32.cont [13/16] 0.0, 128
    %93 = vxpose.xlu0.b32.cont [14/16] 0.0, 128
    %94 = vxpose.xlu0.b32.cont [15/16] 0.0, 128
    %95 = vxpose.xlu0.b32.end [16/16] 0.0, 128
    %v96 = vpop.trf.xlu0
    %v97 = vpop.trf.xlu0
    %v98 = vpop.trf.xlu0
    %v99 = vpop.trf.xlu0
    %v100 = vpop.trf.xlu0
    %v101 = vpop.trf.xlu0
    %v102 = vpop.trf.xlu0
    %v103 = vpop.trf.xlu0
    %v104 = vpop.trf.xlu0
    %v105 = vpop.trf.xlu0
    %v106 = vpop.trf.xlu0
    %v107 = vpop.trf.xlu0
    %v108 = vpop.trf.xlu0
    %v109 = vpop.trf.xlu0
    %v110 = vpop.trf.xlu0
    %v111 = vpop.trf.xlu0
    %vm112 = vcmask 261120
    %v114 = vsel %vm112, %v96, 0
    %v117 = vsel %vm112, %v97, 0
    %v120 = vsel %vm112, %v98, 0
    %v123 = vsel %vm112, %v99, 0
    %125 = vmatprep.subr.mxu0 0.0
    %126 = vmatpush1.msra.mxu0 %v56
    %127 = vmatprep.subr.mxu0 0.0
    %128 = vmatpush1.msra.mxu0 %v57
    %129 = vmatprep.subr.mxu0 0.0
    %130 = vmatpush1.msra.mxu0 %v58
    %131 = vmatprep.subr.mxu0 0.0
    %132 = vmatpush1.msra.mxu0 %v59
    %133 = vmatprep.subr.mxu0 0.0
    %134 = vmatpush1.msra.mxu0 0.0
    %135 = vmatprep.subr.mxu0 0.0
    %136 = vmatpush1.msra.mxu0 0.0
    %137 = vmatprep.subr.mxu0 0.0
    %138 = vmatpush1.msra.mxu0 0.0
    %139 = vmatprep.subr.mxu0 0.0
    %140 = vmatpush1.msra.mxu0 0.0
    %141 = vmatprep.subr.mxu0 0.0
    %142 = vmatpush1.msra.mxu0 0.0
    %143 = vmatprep.subr.mxu0 0.0
    %144 = vmatpush1.msra.mxu0 0.0
    %145 = vmatprep.subr.mxu0 0.0
    %146 = vmatpush1.msra.mxu0 0.0
    %147 = vmatprep.subr.mxu0 0.0
    %148 = vmatpush1.msra.mxu0 0.0
    %149 = vmatprep.subr.mxu0 0.0
    %150 = vmatpush1.msra.mxu0 0.0
    %151 = vmatprep.subr.mxu0 0.0
    %152 = vmatpush1.msra.mxu0 0.0
    %153 = vmatprep.subr.mxu0 0.0
    %154 = vmatpush1.msra.mxu0 0.0
    %155 = vmatprep.subr.mxu0 0.0
    %156 = vmatpush1.msra.mxu0 0.0
    %157 = vmatprep.subr.mxu0 0.0
    %158 = vmatpush1.msra.mxu0 0.0
    %159 = vmatprep.subr.mxu0 0.0
    %160 = vmatpush1.msra.mxu0 0.0
    %161 = vmatprep.subr.mxu0 0.0
    %162 = vmatpush1.msra.mxu0 0.0
    %163 = vmatprep.subr.mxu0 0.0
    %164 = vmatpush1.msra.mxu0 0.0
    %165 = vmatprep.subr.mxu0 0.0
    %166 = vmatpush1.msra.mxu0 0.0
    %167 = vmatprep.subr.mxu0 0.0
    %168 = vmatpush1.msra.mxu0 0.0
    %169 = vmatprep.subr.mxu0 0.0
    %170 = vmatpush1.msra.mxu0 0.0
    %171 = vmatprep.subr.mxu0 0.0
    %172 = vmatpush1.msra.mxu0 0.0
    %173 = vmatprep.subr.mxu0 0.0
    %174 = vmatpush1.msra.mxu0 0.0
    %175 = vmatprep.subr.mxu0 0.0
    %176 = vmatpush1.msra.mxu0 0.0
    %177 = vmatprep.subr.mxu0 0.0
    %178 = vmatpush1.msra.mxu0 0.0
    %179 = vmatprep.subr.mxu0 0.0
    %180 = vmatpush1.msra.mxu0 0.0
    %181 = vmatprep.subr.mxu0 0.0
    %182 = vmatpush1.msra.mxu0 0.0
    %183 = vmatprep.subr.mxu0 0.0
    %184 = vmatpush1.msra.mxu0 0.0
    %185 = vmatprep.subr.mxu0 0.0
    %186 = vmatpush1.msra.mxu0 0.0
    %187 = vmatprep.subr.mxu0 0.0
    %188 = vmatpush1.msra.mxu0 0.0
    %189 = vmatprep.mubr.f32.mxu0 0.0
    %190 = vmatmul.mubr.f32.gmra.mrb[0].mxu0 %v114
    %v191 = vpop.f32.mrb[0].mxu0
    %v192 = vadd.f32 0.0, %v191
    %v193 = vpop.f32.mrb[0].mxu0
    %194 = vmatprep.mubr.f32.mxu0 0.0
    %195 = vmatmul.mubr.f32.gmra.mrb[0].mxu0 %v117
    %v196 = vpop.f32.mrb[0].mxu0
    %v197 = vadd.f32 0.0, %v196
    %v198 = vpop.f32.mrb[0].mxu0
    %199 = vmatprep.mubr.f32.mxu0 0.0
    %200 = vmatmul.mubr.f32.gmra.mrb[0].mxu0 %v120
    %v201 = vpop.f32.mrb[0].mxu0
    %v202 = vadd.f32 0.0, %v201
    %v203 = vpop.f32.mrb[0].mxu0
    %204 = vmatprep.mubr.f32.mxu0 0.0
    %205 = vmatmul.mubr.f32.gmra.mrb[0].mxu0 %v123
    %v206 = vpop.f32.mrb[0].mxu0
    %v207 = vadd.f32 0.0, %v206
    %v208 = vpop.f32.mrb[0].mxu0
    %209 = vdwg.mxu0
    %v210 = vmul.f32 %v192, %v192
    %v211 = vmul.f32 %v197, %v197
    %v212 = vmul.f32 %v202, %v202
    %v213 = vmul.f32 %v207, %v207
    %v214 = vsel %vm112, %v210, 0.0
    %v215 = vsel %vm112, %v211, 0.0
    %v216 = vadd.f32 %v214, %v215
    %v217 = vsel %vm112, %v212, 0.0
    %v218 = vadd.f32 %v216, %v217
    %v219 = vsel %vm112, %v213, 0.0
    %v220 = vadd.f32 %v218, %v219
    %221 = vadd.xlane.f32.xlu0 %v220
    %v222 = vpop.xlane.xlu0 %221
    %v223 = vrot.slane %v222, 4
    %v224 = vadd.f32 %v222, %v223
    %v225 = vrot.slane %v224, 2
    %v226 = vadd.f32 %v224, %v225
    %v227 = vrot.slane %v226, 1
    %v228 = vadd.f32 %v226, %v227
    %s229 = vtos %v228
    %v230 = vstv %s229
    %v231 = vrsqrt.pop %v230
    %v232 = vmul.f32 %v230, %v231
    %vm233 = vcmp.eq.f32.partialorder %v230, inf
    %v234 = vsel %vm233, %v230, %v232
    %vm235 = vcmp.eq.f32.partialorder %v230, 0.0
    %v236 = vand.u32 %v230, 2147483648
    %v237 = vsel %vm235, %v236, %v234
    %s238 = vtos %v237
    %s239 = sadd.f32 %s238, 1e-12
    %v240 = vstv %s239
    %v241 = vrcp.pop %v240
    %s242 = vtos %v241
    %s243 = smul.f32 0.8, %s242
    %v244 = vstv %s243
    %v245 = vmul.f32 %v244, %v192
    %v246 = vmul.f32 %v244, %v197
    %v247 = vmul.f32 %v244, %v202
    %v248 = vmul.f32 %v244, %v207
    // While loop
    $region26: #{tpu_custom_call.1} parent=1 // loop_pre_header
      _
    $region27: #{tpu_custom_call.1} parent=1 // loop_header
      %s250 = sphi 0, %s634
      %v251 = vphi %v76, %v596
      %v252 = vphi %v77, %v601
      %v253 = vphi %v78, %v606
      %v254 = vphi %v79, %v611
      %s255 = sphi inf, %s633
      %p256 = scmp.lt.s32.totalorder %s250, 50
      %p257 = scmp.ge.f32.partialorder %s255, 1e-12
      %p258 = pnand %p256, %p257
      %p259 = pneg %p258
    $region28: #{tpu_custom_call.1} parent=1 // loop_header_branch
      %261 = sbr.rel (%p258) target = $region32
    $region29: #{tpu_custom_call.1} parent=1 // loop_body
      %262 = vmatprep.subr.mxu0 0.0
      %263 = vmatpush1.msra.mxu0 %v60
      %264 = vmatprep.subr.mxu0 0.0
      %265 = vmatpush1.msra.mxu0 %v61
      %266 = vmatprep.subr.mxu0 0.0
      %267 = vmatpush1.msra.mxu0 %v62
      %268 = vmatprep.subr.mxu0 0.0
      %269 = vmatpush1.msra.mxu0 %v63
      %270 = vmatprep.subr.mxu0 0.0
      %271 = vmatpush1.msra.mxu0 %v64
      %272 = vmatprep.subr.mxu0 0.0
      %273 = vmatpush1.msra.mxu0 %v65
      %274 = vmatprep.subr.mxu0 0.0
      %275 = vmatpush1.msra.mxu0 %v66
      %276 = vmatprep.subr.mxu0 0.0
      %277 = vmatpush1.msra.mxu0 %v67
      %278 = vmatprep.subr.mxu0 0.0
      %279 = vmatpush1.msra.mxu0 %v68
      %280 = vmatprep.subr.mxu0 0.0
      %281 = vmatpush1.msra.mxu0 %v69
      %282 = vmatprep.subr.mxu0 0.0
      %283 = vmatpush1.msra.mxu0 %v70
      %284 = vmatprep.subr.mxu0 0.0
      %285 = vmatpush1.msra.mxu0 %v71
      %286 = vmatprep.subr.mxu0 0.0
      %287 = vmatpush1.msra.mxu0 %v72
      %288 = vmatprep.subr.mxu0 0.0
      %289 = vmatpush1.msra.mxu0 %v73
      %290 = vmatprep.subr.mxu0 0.0
      %291 = vmatpush1.msra.mxu0 %v74
      %292 = vmatprep.subr.mxu0 0.0
      %293 = vmatpush1.msra.mxu0 %v75
      %294 = vmatprep.subr.mxu0 0.0
      %295 = vmatpush1.msra.mxu0 0.0
      %296 = vmatprep.subr.mxu0 0.0
      %297 = vmatpush1.msra.mxu0 0.0
      %298 = vmatprep.subr.mxu0 0.0
      %299 = vmatpush1.msra.mxu0 0.0
      %300 = vmatprep.subr.mxu0 0.0
      %301 = vmatpush1.msra.mxu0 0.0
      %302 = vmatprep.subr.mxu0 0.0
      %303 = vmatpush1.msra.mxu0 0.0
      %304 = vmatprep.subr.mxu0 0.0
      %305 = vmatpush1.msra.mxu0 0.0
      %306 = vmatprep.subr.mxu0 0.0
      %307 = vmatpush1.msra.mxu0 0.0
      %308 = vmatprep.subr.mxu0 0.0
      %309 = vmatpush1.msra.mxu0 0.0
      %310 = vmatprep.subr.mxu0 0.0
      %311 = vmatpush1.msra.mxu0 0.0
      %312 = vmatprep.subr.mxu0 0.0
      %313 = vmatpush1.msra.mxu0 0.0
      %314 = vmatprep.subr.mxu0 0.0
      %315 = vmatpush1.msra.mxu0 0.0
      %316 = vmatprep.subr.mxu0 0.0
      %317 = vmatpush1.msra.mxu0 0.0
      %318 = vmatprep.subr.mxu0 0.0
      %319 = vmatpush1.msra.mxu0 0.0
      %320 = vmatprep.subr.mxu0 0.0
      %321 = vmatpush1.msra.mxu0 0.0
      %322 = vmatprep.subr.mxu0 0.0
      %323 = vmatpush1.msra.mxu0 0.0
      %324 = vmatprep.subr.mxu0 0.0
      %325 = vmatpush1.msra.mxu0 0.0
      %326 = vmatprep.mubr.f32.mxu0 0.0
      %327 = vmatmul.mubr.f32.gmra.mrb[0].mxu0 %v251
      %v328 = vpop.f32.mrb[0].mxu0
      %v329 = vadd.f32 0.0, %v328
      %v330 = vpop.f32.mrb[0].mxu0
      %331 = vmatprep.mubr.f32.mxu0 0.0
      %332 = vmatmul.mubr.f32.gmra.mrb[0].mxu0 %v252
      %v333 = vpop.f32.mrb[0].mxu0
      %v334 = vadd.f32 0.0, %v333
      %v335 = vpop.f32.mrb[0].mxu0
      %336 = vmatprep.mubr.f32.mxu0 0.0
      %337 = vmatmul.mubr.f32.gmra.mrb[0].mxu0 %v253
      %v338 = vpop.f32.mrb[0].mxu0
      %v339 = vadd.f32 0.0, %v338
      %v340 = vpop.f32.mrb[0].mxu0
      %341 = vmatprep.mubr.f32.mxu0 0.0
      %342 = vmatmul.mubr.f32.gmra.mrb[0].mxu0 %v254
      %v343 = vpop.f32.mrb[0].mxu0
      %v344 = vadd.f32 0.0, %v343
      %v345 = vpop.f32.mrb[0].mxu0
      %346 = vdwg.mxu0
      %v348 = vsel %vm112, %v245, 0
      %v351 = vsel %vm112, %v246, 0
      %v354 = vsel %vm112, %v247, 0
      %v357 = vsel %vm112, %v248, 0
      %359 = vmatprep.subr.mxu0 0.0
      %360 = vmatpush1.msra.mxu0 %v329
      %361 = vmatprep.subr.mxu0 0.0
      %362 = vmatpush1.msra.mxu0 %v334
      %363 = vmatprep.subr.mxu0 0.0
      %364 = vmatpush1.msra.mxu0 %v339
      %365 = vmatprep.subr.mxu0 0.0
      %366 = vmatpush1.msra.mxu0 %v344
      %367 = vmatprep.subr.mxu0 0.0
      %368 = vmatpush1.msra.mxu0 0.0
      %369 = vmatprep.subr.mxu0 0.0
      %370 = vmatpush1.msra.mxu0 0.0
      %371 = vmatprep.subr.mxu0 0.0
      %372 = vmatpush1.msra.mxu0 0.0
      %373 = vmatprep.subr.mxu0 0.0
      %374 = vmatpush1.msra.mxu0 0.0
      %375 = vmatprep.subr.mxu0 0.0
      %376 = vmatpush1.msra.mxu0 0.0
      %377 = vmatprep.subr.mxu0 0.0
      %378 = vmatpush1.msra.mxu0 0.0
      %379 = vmatprep.subr.mxu0 0.0
      %380 = vmatpush1.msra.mxu0 0.0
      %381 = vmatprep.subr.mxu0 0.0
      %382 = vmatpush1.msra.mxu0 0.0
      %383 = vmatprep.subr.mxu0 0.0
      %384 = vmatpush1.msra.mxu0 0.0
      %385 = vmatprep.subr.mxu0 0.0
      %386 = vmatpush1.msra.mxu0 0.0
      %387 = vmatprep.subr.mxu0 0.0
      %388 = vmatpush1.msra.mxu0 0.0
      %389 = vmatprep.subr.mxu0 0.0
      %390 = vmatpush1.msra.mxu0 0.0
      %391 = vmatprep.subr.mxu0 0.0
      %392 = vmatpush1.msra.mxu0 0.0
      %393 = vmatprep.subr.mxu0 0.0
      %394 = vmatpush1.msra.mxu0 0.0
      %395 = vmatprep.subr.mxu0 0.0
      %396 = vmatpush1.msra.mxu0 0.0
      %397 = vmatprep.subr.mxu0 0.0
      %398 = vmatpush1.msra.mxu0 0.0
      %399 = vmatprep.subr.mxu0 0.0
      %400 = vmatpush1.msra.mxu0 0.0
      %401 = vmatprep.subr.mxu0 0.0
      %402 = vmatpush1.msra.mxu0 0.0
      %403 = vmatprep.subr.mxu0 0.0
      %404 = vmatpush1.msra.mxu0 0.0
      %405 = vmatprep.subr.mxu0 0.0
      %406 = vmatpush1.msra.mxu0 0.0
      %407 = vmatprep.subr.mxu0 0.0
      %408 = vmatpush1.msra.mxu0 0.0
      %409 = vmatprep.subr.mxu0 0.0
      %410 = vmatpush1.msra.mxu0 0.0
      %411 = vmatprep.subr.mxu0 0.0
      %412 = vmatpush1.msra.mxu0 0.0
      %413 = vmatprep.subr.mxu0 0.0
      %414 = vmatpush1.msra.mxu0 0.0
      %415 = vmatprep.subr.mxu0 0.0
      %416 = vmatpush1.msra.mxu0 0.0
      %417 = vmatprep.subr.mxu0 0.0
      %418 = vmatpush1.msra.mxu0 0.0
      %419 = vmatprep.subr.mxu0 0.0
      %420 = vmatpush1.msra.mxu0 0.0
      %421 = vmatprep.subr.mxu0 0.0
      %422 = vmatpush1.msra.mxu0 0.0
      %423 = vmatprep.mubr.f32.mxu0 0.0
      %424 = vmatmul.mubr.f32.gmra.mrb[0].mxu0 %v348
      %v425 = vpop.f32.mrb[0].mxu0
      %v426 = vadd.f32 %v76, %v425
      %v427 = vpop.f32.mrb[0].mxu0
      %428 = vmatprep.mubr.f32.mxu0 0.0
      %429 = vmatmul.mubr.f32.gmra.mrb[0].mxu0 %v351
      %v430 = vpop.f32.mrb[0].mxu0
      %v431 = vadd.f32 %v77, %v430
      %v432 = vpop.f32.mrb[0].mxu0
      %433 = vmatprep.mubr.f32.mxu0 0.0
      %434 = vmatmul.mubr.f32.gmra.mrb[0].mxu0 %v354
      %v435 = vpop.f32.mrb[0].mxu0
      %v436 = vadd.f32 %v78, %v435
      %v437 = vpop.f32.mrb[0].mxu0
      %438 = vmatprep.mubr.f32.mxu0 0.0
      %439 = vmatmul.mubr.f32.gmra.mrb[0].mxu0 %v357
      %v440 = vpop.f32.mrb[0].mxu0
      %v441 = vadd.f32 %v79, %v440
      %v442 = vpop.f32.mrb[0].mxu0
      %443 = vdwg.mxu0
      %444 = vmatprep.subr.mxu0 0.0
      %445 = vmatpush1.msra.mxu0 %v60
      %446 = vmatprep.subr.mxu0 0.0
      %447 = vmatpush1.msra.mxu0 %v61
      %448 = vmatprep.subr.mxu0 0.0
      %449 = vmatpush1.msra.mxu0 %v62
      %450 = vmatprep.subr.mxu0 0.0
      %451 = vmatpush1.msra.mxu0 %v63
      %452 = vmatprep.subr.mxu0 0.0
      %453 = vmatpush1.msra.mxu0 %v64
      %454 = vmatprep.subr.mxu0 0.0
      %455 = vmatpush1.msra.mxu0 %v65
      %456 = vmatprep.subr.mxu0 0.0
      %457 = vmatpush1.msra.mxu0 %v66
      %458 = vmatprep.subr.mxu0 0.0
      %459 = vmatpush1.msra.mxu0 %v67
      %460 = vmatprep.subr.mxu0 0.0
      %461 = vmatpush1.msra.mxu0 %v68
      %462 = vmatprep.subr.mxu0 0.0
      %463 = vmatpush1.msra.mxu0 %v69
      %464 = vmatprep.subr.mxu0 0.0
      %465 = vmatpush1.msra.mxu0 %v70
      %466 = vmatprep.subr.mxu0 0.0
      %467 = vmatpush1.msra.mxu0 %v71
      %468 = vmatprep.subr.mxu0 0.0
      %469 = vmatpush1.msra.mxu0 %v72
      %470 = vmatprep.subr.mxu0 0.0
      %471 = vmatpush1.msra.mxu0 %v73
      %472 = vmatprep.subr.mxu0 0.0
      %473 = vmatpush1.msra.mxu0 %v74
      %474 = vmatprep.subr.mxu0 0.0
      %475 = vmatpush1.msra.mxu0 %v75
      %476 = vmatprep.subr.mxu0 0.0
      %477 = vmatpush1.msra.mxu0 0.0
      %478 = vmatprep.subr.mxu0 0.0
      %479 = vmatpush1.msra.mxu0 0.0
      %480 = vmatprep.subr.mxu0 0.0
      %481 = vmatpush1.msra.mxu0 0.0
      %482 = vmatprep.subr.mxu0 0.0
      %483 = vmatpush1.msra.mxu0 0.0
      %484 = vmatprep.subr.mxu0 0.0
      %485 = vmatpush1.msra.mxu0 0.0
      %486 = vmatprep.subr.mxu0 0.0
      %487 = vmatpush1.msra.mxu0 0.0
      %488 = vmatprep.subr.mxu0 0.0
      %489 = vmatpush1.msra.mxu0 0.0
      %490 = vmatprep.subr.mxu0 0.0
      %491 = vmatpush1.msra.mxu0 0.0
      %492 = vmatprep.subr.mxu0 0.0
      %493 = vmatpush1.msra.mxu0 0.0
      %494 = vmatprep.subr.mxu0 0.0
      %495 = vmatpush1.msra.mxu0 0.0
      %496 = vmatprep.subr.mxu0 0.0
      %497 = vmatpush1.msra.mxu0 0.0
      %498 = vmatprep.subr.mxu0 0.0
      %499 = vmatpush1.msra.mxu0 0.0
      %500 = vmatprep.subr.mxu0 0.0
      %501 = vmatpush1.msra.mxu0 0.0
      %502 = vmatprep.subr.mxu0 0.0
      %503 = vmatpush1.msra.mxu0 0.0
      %504 = vmatprep.subr.mxu0 0.0
      %505 = vmatpush1.msra.mxu0 0.0
      %506 = vmatprep.subr.mxu0 0.0
      %507 = vmatpush1.msra.mxu0 0.0
      %508 = vmatprep.mubr.f32.mxu0 0.0
      %509 = vmatmul.mubr.f32.gmra.mrb[0].mxu0 %v426
      %v510 = vpop.f32.mrb[0].mxu0
      %v511 = vadd.f32 0.0, %v510
      %v512 = vpop.f32.mrb[0].mxu0
      %513 = vmatprep.mubr.f32.mxu0 0.0
      %514 = vmatmul.mubr.f32.gmra.mrb[0].mxu0 %v431
      %v515 = vpop.f32.mrb[0].mxu0
      %v516 = vadd.f32 0.0, %v515
      %v517 = vpop.f32.mrb[0].mxu0
      %518 = vmatprep.mubr.f32.mxu0 0.0
      %519 = vmatmul.mubr.f32.gmra.mrb[0].mxu0 %v436
      %v520 = vpop.f32.mrb[0].mxu0
      %v521 = vadd.f32 0.0, %v520
      %v522 = vpop.f32.mrb[0].mxu0
      %523 = vmatprep.mubr.f32.mxu0 0.0
      %524 = vmatmul.mubr.f32.gmra.mrb[0].mxu0 %v441
      %v525 = vpop.f32.mrb[0].mxu0
      %v526 = vadd.f32 0.0, %v525
      %v527 = vpop.f32.mrb[0].mxu0
      %528 = vdwg.mxu0
      %529 = vmatprep.subr.mxu0 0.0
      %530 = vmatpush1.msra.mxu0 %v511
      %531 = vmatprep.subr.mxu0 0.0
      %532 = vmatpush1.msra.mxu0 %v516
      %533 = vmatprep.subr.mxu0 0.0
      %534 = vmatpush1.msra.mxu0 %v521
      %535 = vmatprep.subr.mxu0 0.0
      %536 = vmatpush1.msra.mxu0 %v526
      %537 = vmatprep.subr.mxu0 0.0
      %538 = vmatpush1.msra.mxu0 0.0
      %539 = vmatprep.subr.mxu0 0.0
      %540 = vmatpush1.msra.mxu0 0.0
      %541 = vmatprep.subr.mxu0 0.0
      %542 = vmatpush1.msra.mxu0 0.0
      %543 = vmatprep.subr.mxu0 0.0
      %544 = vmatpush1.msra.mxu0 0.0
      %545 = vmatprep.subr.mxu0 0.0
      %546 = vmatpush1.msra.mxu0 0.0
      %547 = vmatprep.subr.mxu0 0.0
      %548 = vmatpush1.msra.mxu0 0.0
      %549 = vmatprep.subr.mxu0 0.0
      %550 = vmatpush1.msra.mxu0 0.0
      %551 = vmatprep.subr.mxu0 0.0
      %552 = vmatpush1.msra.mxu0 0.0
      %553 = vmatprep.subr.mxu0 0.0
      %554 = vmatpush1.msra.mxu0 0.0
      %555 = vmatprep.subr.mxu0 0.0
      %556 = vmatpush1.msra.mxu0 0.0
      %557 = vmatprep.subr.mxu0 0.0
      %558 = vmatpush1.msra.mxu0 0.0
      %559 = vmatprep.subr.mxu0 0.0
      %560 = vmatpush1.msra.mxu0 0.0
      %561 = vmatprep.subr.mxu0 0.0
      %562 = vmatpush1.msra.mxu0 0.0
      %563 = vmatprep.subr.mxu0 0.0
      %564 = vmatpush1.msra.mxu0 0.0
      %565 = vmatprep.subr.mxu0 0.0
      %566 = vmatpush1.msra.mxu0 0.0
      %567 = vmatprep.subr.mxu0 0.0
      %568 = vmatpush1.msra.mxu0 0.0
      %569 = vmatprep.subr.mxu0 0.0
      %570 = vmatpush1.msra.mxu0 0.0
      %571 = vmatprep.subr.mxu0 0.0
      %572 = vmatpush1.msra.mxu0 0.0
      %573 = vmatprep.subr.mxu0 0.0
      %574 = vmatpush1.msra.mxu0 0.0
      %575 = vmatprep.subr.mxu0 0.0
      %576 = vmatpush1.msra.mxu0 0.0
      %577 = vmatprep.subr.mxu0 0.0
      %578 = vmatpush1.msra.mxu0 0.0
      %579 = vmatprep.subr.mxu0 0.0
      %580 = vmatpush1.msra.mxu0 0.0
      %581 = vmatprep.subr.mxu0 0.0
      %582 = vmatpush1.msra.mxu0 0.0
      %583 = vmatprep.subr.mxu0 0.0
      %584 = vmatpush1.msra.mxu0 0.0
      %585 = vmatprep.subr.mxu0 0.0
      %586 = vmatpush1.msra.mxu0 0.0
      %587 = vmatprep.subr.mxu0 0.0
      %588 = vmatpush1.msra.mxu0 0.0
      %589 = vmatprep.subr.mxu0 0.0
      %590 = vmatpush1.msra.mxu0 0.0
      %591 = vmatprep.subr.mxu0 0.0
      %592 = vmatpush1.msra.mxu0 0.0
      %593 = vmatprep.mubr.f32.mxu0 0.0
      %594 = vmatmul.mubr.f32.gmra.mrb[0].mxu0 %v348
      %v595 = vpop.f32.mrb[0].mxu0
      %v596 = vadd.f32 %v76, %v595
      %v597 = vpop.f32.mrb[0].mxu0
      %598 = vmatprep.mubr.f32.mxu0 0.0
      %599 = vmatmul.mubr.f32.gmra.mrb[0].mxu0 %v351
      %v600 = vpop.f32.mrb[0].mxu0
      %v601 = vadd.f32 %v77, %v600
      %v602 = vpop.f32.mrb[0].mxu0
      %603 = vmatprep.mubr.f32.mxu0 0.0
      %604 = vmatmul.mubr.f32.gmra.mrb[0].mxu0 %v354
      %v605 = vpop.f32.mrb[0].mxu0
      %v606 = vadd.f32 %v78, %v605
      %v607 = vpop.f32.mrb[0].mxu0
      %608 = vmatprep.mubr.f32.mxu0 0.0
      %609 = vmatmul.mubr.f32.gmra.mrb[0].mxu0 %v357
      %v610 = vpop.f32.mrb[0].mxu0
      %v611 = vadd.f32 %v79, %v610
      %v612 = vpop.f32.mrb[0].mxu0
      %613 = vdwg.mxu0
      %v614 = vsub.f32 %v596, %v426
      %v615 = vsub.f32 %v601, %v431
      %v616 = vsub.f32 %v606, %v436
      %v617 = vsub.f32 %v611, %v441
      %v618 = vmul.f32 %v614, %v614
      %v619 = vmul.f32 %v615, %v615
      %v620 = vmul.f32 %v616, %v616
      %v621 = vmul.f32 %v617, %v617
      %v622 = vadd.f32 %v618, %v619
      %v623 = vadd.f32 %v622, %v620
      %v624 = vadd.f32 %v623, %v621
      %625 = vadd.xlane.f32.xlu0 %v624
      %v626 = vpop.xlane.xlu0 %625
      %v627 = vrot.slane %v626, 4
      %v628 = vadd.f32 %v626, %v627
      %v629 = vrot.slane %v628, 2
      %v630 = vadd.f32 %v628, %v629
      %v631 = vrot.slane %v630, 1
      %v632 = vadd.f32 %v630, %v631
      %s633 = vtos %v632
      %s634 = sadd.s32 %s250, 2
    $region30: #{tpu_custom_call.1} parent=1 // loop_footer
      _
    $region31: #{tpu_custom_call.1} parent=1 // loop_footer_branch
      %249 = sbr.rel target = $region27
    $region32: #{tpu_custom_call.1} parent=1 // loop_exit
      _
    %635 = vst [vmem:[#allocation8] sm:$0xff] %v251
    %636 = vst [vmem:[#allocation8 + $0x8] sm:$0xff] %v252
    %637 = vst [vmem:[#allocation8 + $0x10] sm:$0xff] %v253
    %638 = vst [vmem:[#allocation8 + $0x18] sm:$0xff] %v254
    // Predicated region
    $region33: #{tpu_custom_call.1} parent=1 // pred_check
      _
    $region34: #{tpu_custom_call.1} parent=1 // pred_check_branch
      %640 = sbr.rel (0) target = $region36
    $region35: #{tpu_custom_call.1} parent=1 // pred_region
      %s642 = ssub.s32 512, 512
      %643 = vsyncadd [#allocation4], %s642
      %s644 = sshll.u32 [#allocation8], 4
      %s645 = int_to_ptr.vmem [resolvable:$true] %s644
      %650 = dma.vmem_to_hbm [thread:$0]  %s645, 512, %s3, [#allocation4], 128, 128, 8
    $region36: #{tpu_custom_call.1} parent=1 // pred_fallthru
      _
    // Predicated region
    $region37: #{tpu_custom_call.1} parent=1 // pred_check
      _
    $region38: #{tpu_custom_call.1} parent=1 // pred_check_branch
      %652 = sbr.rel (0) target = $region40
    $region39: #{tpu_custom_call.1} parent=1 // pred_region
      %653 = dma.done [#allocation4], 512
    $region40: #{tpu_custom_call.1} parent=1 // pred_fallthru
      _
    %654 = vsyncpa [#allocation3], 1
    %655 = vsyncpa [#allocation6], 1
    %656 = vsyncpa [#allocation4], 1

</llo_original>
